<compile_context>
chip_gen: v5e
topology: v5e:2x2
jax: 0.10.0
libtpu: 0.0.40
codegen_flags: <defaults>
</compile_context>

<pallas_src>
import jax
import jax.numpy as jnp
from jax.experimental import pallas as pl
from jax.experimental.pallas import tpu as pltpu


def _make_add_conv1x1_kernel(use_bf16_matmul):
    def kernel(a_ref, b_ref, w_ref, o_ref):
        # a_ref, b_ref: (C_in, HW_blk)   w_ref: (Cout_blk, C_in)
        # o_ref:        (Cout_blk, HW_blk)
        # Residual add in f32 on the VPU (v5e has no bf16 vector ALU path).
        s = a_ref[...] + b_ref[...]
        if use_bf16_matmul:
            lhs = w_ref[...].astype(jnp.bfloat16)
            rhs = s.astype(jnp.bfloat16)
        else:
            lhs = w_ref[...]
            rhs = s
        # Weight-stationary matmul on the MXU, f32 accumulation.
        o_ref[...] = jnp.dot(
            lhs, rhs, preferred_element_type=jnp.float32
        ).astype(o_ref.dtype)

    return kernel


def add_conv1x1(x210, x195, weight, *, use_bf16_matmul=True):
    """x210, x195: (N, C_in, H, W); weight: (C_out, C_in, 1, 1) -> (N, C_out, H, W)."""
    N, C, H, W = x210.shape
    Cout = weight.shape[0]
    HW = H * W

    # Pure reshapes — NCHW is already contiguous in this flattening.
    a = x210.reshape(N, C, HW)
    b = x195.reshape(N, C, HW)
    w = weight.reshape(Cout, C)                    # consumed untransposed

    # ---- C_out tiling: 2-4 tiles so DMA pipelines with compute and the
    #      "parallel" axis feeds v7x's second TensorCore even at N=1.
    #      Tile size must keep the sublane (second-minor) dim a multiple of 8.
    n_co = 1
    for cand in (4, 2, 3):
        if Cout % cand == 0 and (Cout // cand) % 8 == 0:
            n_co = cand
            break
    tco = Cout // n_co

    # ---- HW tiling guard: keep the per-step VMEM footprint well under the
    #      32 MiB scoped default / v7x's 64 MiB physical ceiling.  Only kicks
    #      in for much larger spatial sizes than 14x14.
    def _step_vmem_bytes(hw_blk):
        # double-buffered a, b, out blocks + double-buffered weight tile (f32)
        return 2 * 4 * (2 * C * hw_blk + tco * hw_blk + tco * C)

    thw = HW
    if _step_vmem_bytes(HW) > (24 << 20):
        thw = 128
        while 2 * thw < HW and _step_vmem_bytes(2 * thw) <= (24 << 20):
            thw *= 2
    n_hw = pl.cdiv(HW, thw)

    itemsize = jnp.dtype(x210.dtype).itemsize
    bytes_accessed = (2 * N * C * HW + N * Cout * C + N * Cout * HW) * itemsize

    kernel = _make_add_conv1x1_kernel(use_bf16_matmul)

    out_flat = pl.pallas_call(
        kernel,
        out_shape=jax.ShapeDtypeStruct((N, Cout, HW), x210.dtype),
        # Grid: batch x Cout-tiles x HW-tiles (HW innermost so the weight tile
        # stays resident across HW steps).
        grid=(N, n_co, n_hw),
        in_specs=[
            # Last two block dims are either full-extent (C=120, HW=196) or a
            # multiple of (8, 128), so the tiling constraint is satisfied.
            pl.BlockSpec((pl.Squeezed(), C, thw), lambda n, co, hw: (n, 0, hw)),
            pl.BlockSpec((pl.Squeezed(), C, thw), lambda n, co, hw: (n, 0, hw)),
            pl.BlockSpec((tco, C), lambda n, co, hw: (co, 0)),
        ],
        out_specs=pl.BlockSpec(
            (pl.Squeezed(), tco, thw), lambda n, co, hw: (n, co, hw)
        ),
        compiler_params=pltpu.CompilerParams(
            # Every output block is independent -> all axes parallel; the Cout
            # axis is what splits across v7x's two TensorCores at N=1.
            dimension_semantics=("parallel", "parallel", "parallel"),
        ),
        cost_estimate=pl.CostEstimate(
            flops=2 * N * HW * C * Cout,
            bytes_accessed=bytes_accessed,
            transcendentals=0,
        ),
    )(a, b, w)

    # (N, C_out, H*W) -> (N, C_out, H, W): free reshape, already NCHW order.
    return out_flat.reshape(N, Cout, H, W)


if __name__ == "__main__":
    key = jax.random.PRNGKey(0)
    k1, k2, k3 = jax.random.split(key, 3)

    # Shapes implied by the module's forward pass.
    N, Cin, H, W = 1, 120, 14, 14
    Cout = 720

    x210 = jax.random.normal(k1, (N, Cin, H, W), dtype=jnp.float32)
    x195 = jax.random.normal(k2, (N, Cin, H, W), dtype=jnp.float32)

    # Deterministic Conv2d weight init (kaiming-uniform-like bound, as in PyTorch).
    fan_in = Cin * 1 * 1
    bound = (1.0 / fan_in) ** 0.5
    weight = jax.random.uniform(
        k3, (Cout, Cin, 1, 1), dtype=jnp.float32, minval=-bound, maxval=bound
    )

    # Reference in plain JAX (same math, no Pallas).
    ref = jnp.einsum("nchw,oc->nohw", x210 + x195, weight.reshape(Cout, Cin))

    # Exact f32 path: tight tolerance.
    out_f32 = jax.block_until_ready(
        add_conv1x1(x210, x195, weight, use_bf16_matmul=False)
    )
    assert out_f32.shape == (N, Cout, H, W), out_f32.shape
    assert jnp.allclose(out_f32, ref, atol=1e-4, rtol=1e-4), "f32 path mismatch"

    # Fast bf16-matmul (f32 accumulate) path: looser tolerance (K=120).
    out_bf16 = jax.block_until_ready(
        add_conv1x1(x210, x195, weight, use_bf16_matmul=True)
    )
    assert out_bf16.shape == (N, Cout, H, W), out_bf16.shape
    assert jnp.allclose(out_bf16, ref, atol=3e-2, rtol=3e-2), "bf16 path mismatch"

    print("KERNEL_OK")
</pallas_src>

<mosaic_0001>
module attributes {stable_mosaic.version = 11 : i64} {
  func.func @kernel(%arg0: i32, %arg1: i32, %arg2: i32, %arg3: memref<1x120x196xf32, #tpu.memory_space<vmem>>, %arg4: memref<1x120x196xf32, #tpu.memory_space<vmem>>, %arg5: memref<360x120xf32, #tpu.memory_space<vmem>>, %arg6: memref<1x360x196xf32, #tpu.memory_space<vmem>>) attributes {dimension_semantics = [#tpu.dimension_semantics<parallel>, #tpu.dimension_semantics<parallel>, #tpu.dimension_semantics<parallel>], iteration_bounds = array<i64: 1, 2, 1>, scalar_prefetch = 0 : i64, scratch_operands = 0 : i64, tpu.core_type = #tpu.core_type<tc>, window_params = [{transform_indices = @transform_0, window_bounds = array<i64: 1, 120, 196>}, {transform_indices = @transform_1, window_bounds = array<i64: 1, 120, 196>}, {transform_indices = @transform_2, window_bounds = array<i64: 360, 120>}, {transform_indices = @transform_3, window_bounds = array<i64: 1, 360, 196>}]} {
    %c0 = arith.constant 0 : index
    %c0_0 = arith.constant 0 : index
    %c0_1 = arith.constant 0 : index
    %0 = vector.load %arg3[%c0, %c0_0, %c0_1] : memref<1x120x196xf32, #tpu.memory_space<vmem>>, vector<1x120x196xf32>
    %1 = vector.shape_cast %0 : vector<1x120x196xf32> to vector<120x196xf32>
    %c0_2 = arith.constant 0 : index
    %c0_3 = arith.constant 0 : index
    %c0_4 = arith.constant 0 : index
    %2 = vector.load %arg4[%c0_2, %c0_3, %c0_4] : memref<1x120x196xf32, #tpu.memory_space<vmem>>, vector<1x120x196xf32>
    %3 = vector.shape_cast %2 : vector<1x120x196xf32> to vector<120x196xf32>
    %4 = arith.addf %1, %3 : vector<120x196xf32>
    %c0_5 = arith.constant 0 : index
    %c0_6 = arith.constant 0 : index
    %5 = vector.load %arg5[%c0_5, %c0_6] : memref<360x120xf32, #tpu.memory_space<vmem>>, vector<360x120xf32>
    %cst = arith.constant dense<0.000000e+00> : vector<360x196xf32>
    %6 = tpu.matmul %5, %4, %cst {dimension_numbers = #tpu.dot_dimension_numbers<[1], [0], [0], [1], [0, 0, 1, 1], [], []>} : vector<360x120xf32>, vector<120x196xf32>, vector<360x196xf32> -> vector<360x196xf32>
    %c0_7 = arith.constant 0 : index
    %c0_8 = arith.constant 0 : index
    %c0_9 = arith.constant 0 : index
    %7 = vector.load %arg6[%c0_7, %c0_8, %c0_9] : memref<1x360x196xf32, #tpu.memory_space<vmem>>, vector<1x360x196xf32>
    %8 = vector.shape_cast %7 : vector<1x360x196xf32> to vector<360x196xf32>
    %9 = vector.shape_cast %6 : vector<360x196xf32> to vector<1x360x196xf32>
    tpu.vector_store %arg6[%c0_7, %c0_8, %c0_9], %9 {strides = array<i32>} : memref<1x360x196xf32, #tpu.memory_space<vmem>>, vector<1x360x196xf32>,
    return
  }
  func.func @transform_0(%arg0: i32, %arg1: i32, %arg2: i32) -> (i32, i32, i32) {
    %c0_i32 = arith.constant 0 : i32
    %c0_i32_0 = arith.constant 0 : i32
    return %arg0, %c0_i32, %arg2 : i32, i32, i32
  }
  func.func @transform_1(%arg0: i32, %arg1: i32, %arg2: i32) -> (i32, i32, i32) {
    %c0_i32 = arith.constant 0 : i32
    %c0_i32_0 = arith.constant 0 : i32
    return %arg0, %c0_i32, %arg2 : i32, i32, i32
  }
  func.func @transform_2(%arg0: i32, %arg1: i32, %arg2: i32) -> (i32, i32) {
    %c0_i32 = arith.constant 0 : i32
    %c0_i32_0 = arith.constant 0 : i32
    return %arg1, %c0_i32 : i32, i32
  }
  func.func @transform_3(%arg0: i32, %arg1: i32, %arg2: i32) -> (i32, i32, i32) {
    %c0_i32 = arith.constant 0 : i32
    return %arg0, %arg1, %arg2 : i32, i32, i32
  }
}

</mosaic_0001>

<llo_original>
// kernel: tpu_custom_call.1
$region0: #{tpu_custom_call.1}
  #allocation0 [shape = 'u32[]', space=smem, size = 0x4, offset = 0x4, fixed_abs, tag = 'smem constant byte address 0x4 - core index']
  #allocation1 [shape = 'u32[72,128]{1,0:T(1,128)}', space=vmem, size = 0x9000, scoped, tag = 'internal scratch']
  %s0 = inlined_call_operand.vmem [shape: f32[1,120,196], index: 0, kind: input, shape index: {}]
  %s1 = inlined_call_operand.vmem [shape: f32[1,120,196], index: 1, kind: input, shape index: {}]
  %s2 = inlined_call_operand.vmem [shape: f32[720,120], index: 2, kind: input, shape index: {}]
  %s3 = inlined_call_operand.vmem [shape: f32[1,720,196], index: 3, kind: output, shape index: {}]
  %s4 = sld [smem:[#allocation0]]
  $region45: #{tpu_custom_call.1} parent=0
    _
  %s6 = ssub.s32 1, %s4
  %s7 = scalar_select 0, %s6, %s4
  loop: start=0, step=1, limit=4
  $region2: #{tpu_custom_call.1} parent=0 // loop_pre_header
    _
  $region3: #{tpu_custom_call.1} parent=0 // loop_header
    %s9 = sphi 0, %s13
    %p10 = scmp.ge.s32.totalorder %s9, 4
    %s16 = sphi 0, %s35
    %s17 = sphi 0, %s31
    %s18 = sphi 0, %s27
    %s19 = sphi 0, %s16
    %s20 = sphi 0, %s17
    %s21 = sphi 0, %s18
    %s22 = sphi 0, %s19
    %s23 = sphi 0, %s20
    %s24 = sphi 0, %s21
    %s40 = sphi 0, %s42
    %s43 = sphi 0, %s40
    %s44 = sphi 0, %s43
    %s60 = sphi 0, %s44
    %s68 = sphi 0, %s70
    %s71 = sphi 0, %s68
    %s72 = sphi 0, %s71
    %s88 = sphi 0, %s72
    %s94 = sphi 0, %s96
    %s97 = sphi 0, %s94
    %s98 = sphi 0, %s97
    %s114 = sphi 0, %s98
    %s124 = sphi 0, %s126
    %s127 = sphi 0, %s124
    %s128 = sphi 0, %s127
    %s144 = sphi 0, %s128
  $region4: #{tpu_custom_call.1} parent=0 // loop_header_branch
    %12 = sbr.rel (%p10) target = $region8
  $region5: #{tpu_custom_call.1} parent=0 // loop_body
    %s14 = ssub.s32 %s9, 1
    %s15 = ssub.s32 %s9, 2
    %s25 = sadd.s32 1, %s18
    %p26 = scmp.ge.s32.totalorder %s25, 1
    %s27 = scalar_select %p26, 0, %s25
    %s28 = sadd.s32 1, %s17
    %s29 = scalar_select %p26, %s28, %s17
    %p30 = scmp.ge.s32.totalorder %s29, 2
    %s31 = scalar_select %p30, 0, %s29
    %s32 = sadd.s32 1, %s16
    %s33 = scalar_select %p30, %s32, %s16
    %p34 = scmp.ge.s32.totalorder %s33, 1
    %s35 = scalar_select %p34, 0, %s33
    %s36 = ssub.s32 %s16, %s35
    %s37 = ssub.s32 %s18, %s27
    %s38 = sor.u32 %s36, %s37
    %p39 = scmp.eq.s32.totalorder %s38, 0
    %s41 = sadd.s32 %s40, 1
    %s42 = scalar_select %p39, %s40, %s41
    %p45 = pneg %p39
    %p46 = scmp.eq.s32.totalorder %s9, 1
    %p47 = por %p45, %p46
    %p48 = scmp.ne.s32.totalorder %s40, %s43
    %p49 = scmp.eq.s32.totalorder %s9, 0
    %p50 = por %p48, %p49
    %p51 = scmp.ne.s32.totalorder %s40, %s43
    %p52 = scmp.eq.s32.totalorder %s14, 1
    %p53 = por %p51, %p52
    %p54 = scmp.ne.s32.totalorder %s43, %s44
    %p55 = scmp.eq.s32.totalorder %s14, 0
    %p56 = por %p54, %p55
    %p57 = scmp.ne.s32.totalorder %s43, %s44
    %p58 = scmp.eq.s32.totalorder %s15, 1
    %p59 = por %p57, %p58
    %p61 = scmp.ne.s32.totalorder %s44, %s60
    %p62 = scmp.eq.s32.totalorder %s15, 0
    %p63 = por %p61, %p62
    %s64 = ssub.s32 %s16, %s35
    %s65 = ssub.s32 %s18, %s27
    %s66 = sor.u32 %s64, %s65
    %p67 = scmp.eq.s32.totalorder %s66, 0
    %s69 = sadd.s32 %s68, 1
    %s70 = scalar_select %p67, %s68, %s69
    %p73 = pneg %p67
    %p74 = scmp.eq.s32.totalorder %s9, 1
    %p75 = por %p73, %p74
    %p76 = scmp.ne.s32.totalorder %s68, %s71
    %p77 = scmp.eq.s32.totalorder %s9, 0
    %p78 = por %p76, %p77
    %p79 = scmp.ne.s32.totalorder %s68, %s71
    %p80 = scmp.eq.s32.totalorder %s14, 1
    %p81 = por %p79, %p80
    %p82 = scmp.ne.s32.totalorder %s71, %s72
    %p83 = scmp.eq.s32.totalorder %s14, 0
    %p84 = por %p82, %p83
    %p85 = scmp.ne.s32.totalorder %s71, %s72
    %p86 = scmp.eq.s32.totalorder %s15, 1
    %p87 = por %p85, %p86
    %p89 = scmp.ne.s32.totalorder %s72, %s88
    %p90 = scmp.eq.s32.totalorder %s15, 0
    %p91 = por %p89, %p90
    %s92 = ssub.s32 %s17, %s31
    %p93 = scmp.eq.s32.totalorder %s92, 0
    %s95 = sadd.s32 %s94, 1
    %s96 = scalar_select %p93, %s94, %s95
    %p99 = pneg %p93
    %p100 = scmp.eq.s32.totalorder %s9, 1
    %p101 = por %p99, %p100
    %p102 = scmp.ne.s32.totalorder %s94, %s97
    %p103 = scmp.eq.s32.totalorder %s9, 0
    %p104 = por %p102, %p103
    %p105 = scmp.ne.s32.totalorder %s94, %s97
    %p106 = scmp.eq.s32.totalorder %s14, 1
    %p107 = por %p105, %p106
    %p108 = scmp.ne.s32.totalorder %s97, %s98
    %p109 = scmp.eq.s32.totalorder %s14, 0
    %p110 = por %p108, %p109
    %p111 = scmp.ne.s32.totalorder %s97, %s98
    %p112 = scmp.eq.s32.totalorder %s15, 1
    %p113 = por %p111, %p112
    %p115 = scmp.ne.s32.totalorder %s98, %s114
    %p116 = scmp.eq.s32.totalorder %s15, 0
    %p117 = por %p115, %p116
    %s118 = ssub.s32 %s16, %s35
    %s119 = ssub.s32 %s17, %s31
    %s120 = sor.u32 %s118, %s119
    %s121 = ssub.s32 %s18, %s27
    %s122 = sor.u32 %s120, %s121
    %p123 = scmp.eq.s32.totalorder %s122, 0
    %s125 = sadd.s32 %s124, 1
    %s126 = scalar_select %p123, %s124, %s125
    %p129 = pneg %p123
    %p130 = scmp.eq.s32.totalorder %s9, 1
    %p131 = por %p129, %p130
    %p132 = scmp.ne.s32.totalorder %s124, %s127
    %p133 = scmp.eq.s32.totalorder %s9, 0
    %p134 = por %p132, %p133
    %p135 = scmp.ne.s32.totalorder %s124, %s127
    %p136 = scmp.eq.s32.totalorder %s14, 1
    %p137 = por %p135, %p136
    %p138 = scmp.ne.s32.totalorder %s127, %s128
    %p139 = scmp.eq.s32.totalorder %s14, 0
    %p140 = por %p138, %p139
    %p141 = scmp.ne.s32.totalorder %s127, %s128
    %p142 = scmp.eq.s32.totalorder %s15, 1
    %p143 = por %p141, %p142
    %p145 = scmp.ne.s32.totalorder %s128, %s144
    %p146 = scmp.eq.s32.totalorder %s15, 0
    %p147 = por %p145, %p146
    %p148 = scmp.le.s32.totalorder 1, %s9
    %p149 = scmp.lt.s32.totalorder %s9, 3
    %p150 = pnand %p148, %p149
    %p151 = pneg %p150
    // Predicated region
    $region9: #{tpu_custom_call.1} parent=5 // pred_check
      _
    $region10: #{tpu_custom_call.1} parent=5 // pred_check_branch
      %153 = sbr.rel (%p150) target = $region12
    $region11: #{tpu_custom_call.1} parent=5 // pred_region
      %s154 = ssub.s32 %s9, 1
      // Predicated region
      $region13: #{tpu_custom_call.1} parent=11 // pred_check
        %p155 = pneg %p56
      $region14: #{tpu_custom_call.1} parent=11 // pred_check_branch
        %157 = sbr.rel (%p155) target = $region16
      $region15: #{tpu_custom_call.1} parent=11 // pred_region
        %s158 = smul.u32 2, %s21
        %p159 = scmp.lt.s32.totalorder %s19, 0
        %s160 = scalar_select %p159, %s19, 0
        %p161 = scmp.lt.s32.totalorder %s158, 1
        %s162 = scalar_select %p161, %s158, 1
        %s163 = smul.addr %s160, 30
        %s164 = sadd.s32 %s162, %s163
        %s165 = smul.addr %s164, 8
        %s166 = scalar_lea.vmem %s0, %s165
        %s167 = smul.u32 2, %s21
      $region16: #{tpu_custom_call.1} parent=11 // pred_fallthru
        _
      // Predicated region
      $region17: #{tpu_custom_call.1} parent=11 // pred_check
        %p168 = pneg %p84
      $region18: #{tpu_custom_call.1} parent=11 // pred_check_branch
        %170 = sbr.rel (%p168) target = $region20
      $region19: #{tpu_custom_call.1} parent=11 // pred_region
        %s171 = smul.u32 2, %s21
        %p172 = scmp.lt.s32.totalorder %s19, 0
        %s173 = scalar_select %p172, %s19, 0
        %p174 = scmp.lt.s32.totalorder %s171, 1
        %s175 = scalar_select %p174, %s171, 1
        %s176 = smul.addr %s173, 30
        %s177 = sadd.s32 %s175, %s176
        %s178 = smul.addr %s177, 8
        %s179 = scalar_lea.vmem %s1, %s178
        %s180 = smul.u32 2, %s21
      $region20: #{tpu_custom_call.1} parent=11 // pred_fallthru
        _
    $region12: #{tpu_custom_call.1} parent=5 // pred_fallthru
      _
    %p181 = scmp.lt.s32.totalorder %s9, 2
    // Predicated region
    $region21: #{tpu_custom_call.1} parent=5 // pred_check
      %p182 = pneg %p181
    $region22: #{tpu_custom_call.1} parent=5 // pred_check_branch
      %184 = sbr.rel (%p182) target = $region24
    $region23: #{tpu_custom_call.1} parent=5 // pred_region
      // Predicated region
      $region25: #{tpu_custom_call.1} parent=23 // pred_check
        %p185 = pneg %p104
      $region26: #{tpu_custom_call.1} parent=23 // pred_check_branch
        %187 = sbr.rel (%p185) target = $region28
      $region27: #{tpu_custom_call.1} parent=23 // pred_region
        %s188 = smul.u32 45, %s17
        %p189 = scmp.lt.s32.totalorder %s188, 89
        %s190 = scalar_select %p189, %s188, 89
        %s191 = smul.addr %s190, 8
        %s192 = scalar_lea.vmem %s2, %s191
        %s193 = smul.u32 45, %s17
      $region28: #{tpu_custom_call.1} parent=23 // pred_fallthru
        _
    $region24: #{tpu_custom_call.1} parent=5 // pred_fallthru
      _
    %p194 = scmp.le.s32.totalorder 1, %s9
    %p195 = scmp.lt.s32.totalorder %s9, 3
    %p196 = pnand %p194, %p195
    %p197 = pneg %p196
    // Predicated region
    $region29: #{tpu_custom_call.1} parent=5 // pred_check
      _
    $region30: #{tpu_custom_call.1} parent=5 // pred_check_branch
      %199 = sbr.rel (%p196) target = $region32
    $region31: #{tpu_custom_call.1} parent=5 // pred_region
      %s200 = ssub.s32 %s9, 1
      %s201 = smul.u32 2, %s21
      %p202 = scmp.lt.s32.totalorder %s19, 0
      %s203 = scalar_select %p202, %s19, 0
      %p204 = scmp.lt.s32.totalorder %s201, 1
      %s205 = scalar_select %p204, %s201, 1
      %s206 = smul.addr %s203, 30
      %s207 = sadd.s32 %s205, %s206
      %s208 = smul.addr %s207, 8
      %s209 = scalar_lea.vmem %s0, %s208
      %p210 = pneg %p56
      %p211 = pneg %p53
      %s212 = smul.u32 2, %s21
      %p213 = scmp.lt.s32.totalorder %s19, 0
      %s214 = scalar_select %p213, %s19, 0
      %p215 = scmp.lt.s32.totalorder %s212, 1
      %s216 = scalar_select %p215, %s212, 1
      %s217 = smul.addr %s214, 30
      %s218 = sadd.s32 %s216, %s217
      %s219 = smul.addr %s218, 8
      %s220 = scalar_lea.vmem %s1, %s219
      %p221 = pneg %p84
      %p222 = pneg %p81
      %s223 = smul.u32 45, %s20
      %p224 = scmp.lt.s32.totalorder %s223, 89
      %s225 = scalar_select %p224, %s223, 89
      %s226 = smul.addr %s225, 8
      %s227 = scalar_lea.vmem %s2, %s226
      %p228 = pneg %p110
      %p229 = pneg %p107
      %p230 = pneg %p140
      %p231 = pneg %p137
      %s232 = smul.u32 45, %s20
      %s233 = smul.u32 2, %s21
      %p234 = scmp.lt.s32.totalorder %s19, 0
      %s235 = scalar_select %p234, %s19, 0
      %p236 = scmp.lt.s32.totalorder %s232, 89
      %s237 = scalar_select %p236, %s232, 89
      %p238 = scmp.lt.s32.totalorder %s233, 1
      %s239 = scalar_select %p238, %s233, 1
      %s240 = smul.addr %s237, 2
      %s241 = sadd.s32 %s239, %s240
      %s242 = smul.addr %s235, 180
      %s243 = sadd.s32 %s241, %s242
      %s244 = smul.addr %s243, 8
      %s245 = scalar_lea.vmem %s3, %s244
      %s246 = smul.u32 2, %s21
      %p247 = scmp.lt.s32.totalorder %s19, 0
      %s248 = scalar_select %p247, %s19, 0
      %p249 = scmp.lt.s32.totalorder %s246, 1
      %s250 = scalar_select %p249, %s246, 1
      %s251 = smul.addr %s248, 30
      %s252 = sadd.s32 %s250, %s251
      %s253 = smul.addr %s252, 8
      %s254 = scalar_lea.vmem %s0, %s253
      %s255 = smul.u32 2, %s21
      %s256 = smul.u32 2, %s21
      %p257 = scmp.lt.s32.totalorder %s19, 0
      %s258 = scalar_select %p257, %s19, 0
      %p259 = scmp.lt.s32.totalorder %s256, 1
      %s260 = scalar_select %p259, %s256, 1
      %s261 = smul.addr %s258, 30
      %s262 = sadd.s32 %s260, %s261
      %s263 = smul.addr %s262, 8
      %s264 = scalar_lea.vmem %s1, %s263
      %s265 = smul.u32 2, %s21
      %s266 = smul.u32 45, %s20
      %p267 = scmp.lt.s32.totalorder %s266, 89
      %s268 = scalar_select %p267, %s266, 89
      %s269 = smul.addr %s268, 8
      %s270 = scalar_lea.vmem %s2, %s269
      %s271 = smul.u32 45, %s20
      %s272 = smul.u32 45, %s20
      %s273 = smul.u32 2, %s21
      %p274 = scmp.lt.s32.totalorder %s19, 0
      %s275 = scalar_select %p274, %s19, 0
      %p276 = scmp.lt.s32.totalorder %s272, 89
      %s277 = scalar_select %p276, %s272, 89
      %p278 = scmp.lt.s32.totalorder %s273, 1
      %s279 = scalar_select %p278, %s273, 1
      %s280 = smul.addr %s277, 2
      %s281 = sadd.s32 %s279, %s280
      %s282 = smul.addr %s275, 180
      %s283 = sadd.s32 %s281, %s282
      %s284 = smul.addr %s283, 8
      %s285 = scalar_lea.vmem %s3, %s284
      %s286 = smul.u32 45, %s20
      %s287 = smul.u32 2, %s21
      %v288 = vld [vmem:[%s254] sm:$0xff]
      %v289 = vld [vmem:[%s254 + $0x8] sm:$0xff]
      %v290 = vld [vmem:[%s254 + $0x10] sm:$0xff]
      %v291 = vld [vmem:[%s254 + $0x18] sm:$0xff]
      %v292 = vld [vmem:[%s254 + $0x20] sm:$0xff]
      %v293 = vld [vmem:[%s254 + $0x28] sm:$0xff]
      %v294 = vld [vmem:[%s254 + $0x30] sm:$0xff]
      %v295 = vld [vmem:[%s254 + $0x38] sm:$0xff]
      %v296 = vld [vmem:[%s254 + $0x40] sm:$0xff]
      %v297 = vld [vmem:[%s254 + $0x48] sm:$0xff]
      %v298 = vld [vmem:[%s254 + $0x50] sm:$0xff]
      %v299 = vld [vmem:[%s254 + $0x58] sm:$0xff]
      %v300 = vld [vmem:[%s254 + $0x60] sm:$0xff]
      %v301 = vld [vmem:[%s254 + $0x68] sm:$0xff]
      %v302 = vld [vmem:[%s254 + $0x70] sm:$0xff]
      %v303 = vld [vmem:[%s254 + $0x78] sm:$0xff]
      %v304 = vld [vmem:[%s254 + $0x80] sm:$0xff]
      %v305 = vld [vmem:[%s254 + $0x88] sm:$0xff]
      %v306 = vld [vmem:[%s254 + $0x90] sm:$0xff]
      %v307 = vld [vmem:[%s254 + $0x98] sm:$0xff]
      %v308 = vld [vmem:[%s254 + $0xa0] sm:$0xff]
      %v309 = vld [vmem:[%s254 + $0xa8] sm:$0xff]
      %v310 = vld [vmem:[%s254 + $0xb0] sm:$0xff]
      %v311 = vld [vmem:[%s254 + $0xb8] sm:$0xff]
      %v312 = vld [vmem:[%s254 + $0xc0] sm:$0xff]
      %v313 = vld [vmem:[%s254 + $0xc8] sm:$0xff]
      %v314 = vld [vmem:[%s254 + $0xd0] sm:$0xff]
      %v315 = vld [vmem:[%s254 + $0xd8] sm:$0xff]
      %v316 = vld [vmem:[%s254 + $0xe0] sm:$0xff]
      %v317 = vld [vmem:[%s254 + $0xe8] sm:$0xff]
      %v318 = vld [vmem:[%s264] sm:$0xff]
      %v319 = vld [vmem:[%s264 + $0x8] sm:$0xff]
      %v320 = vld [vmem:[%s264 + $0x10] sm:$0xff]
      %v321 = vld [vmem:[%s264 + $0x18] sm:$0xff]
      %v322 = vld [vmem:[%s264 + $0x20] sm:$0xff]
      %v323 = vld [vmem:[%s264 + $0x28] sm:$0xff]
      %v324 = vld [vmem:[%s264 + $0x30] sm:$0xff]
      %v325 = vld [vmem:[%s264 + $0x38] sm:$0xff]
      %v326 = vld [vmem:[%s264 + $0x40] sm:$0xff]
      %v327 = vld [vmem:[%s264 + $0x48] sm:$0xff]
      %v328 = vld [vmem:[%s264 + $0x50] sm:$0xff]
      %v329 = vld [vmem:[%s264 + $0x58] sm:$0xff]
      %v330 = vld [vmem:[%s264 + $0x60] sm:$0xff]
      %v331 = vld [vmem:[%s264 + $0x68] sm:$0xff]
      %v332 = vld [vmem:[%s264 + $0x70] sm:$0xff]
      %v333 = vld [vmem:[%s264 + $0x78] sm:$0xff]
      %v334 = vld [vmem:[%s264 + $0x80] sm:$0xff]
      %v335 = vld [vmem:[%s264 + $0x88] sm:$0xff]
      %v336 = vld [vmem:[%s264 + $0x90] sm:$0xff]
      %v337 = vld [vmem:[%s264 + $0x98] sm:$0xff]
      %v338 = vld [vmem:[%s264 + $0xa0] sm:$0xff]
      %v339 = vld [vmem:[%s264 + $0xa8] sm:$0xff]
      %v340 = vld [vmem:[%s264 + $0xb0] sm:$0xff]
      %v341 = vld [vmem:[%s264 + $0xb8] sm:$0xff]
      %v342 = vld [vmem:[%s264 + $0xc0] sm:$0xff]
      %v343 = vld [vmem:[%s264 + $0xc8] sm:$0xff]
      %v344 = vld [vmem:[%s264 + $0xd0] sm:$0xff]
      %v345 = vld [vmem:[%s264 + $0xd8] sm:$0xff]
      %v346 = vld [vmem:[%s264 + $0xe0] sm:$0xff]
      %v347 = vld [vmem:[%s264 + $0xe8] sm:$0xff]
      %v348 = vadd.f32 %v288, %v318
      %v349 = vadd.f32 %v289, %v319
      %v350 = vadd.f32 %v290, %v320
      %v351 = vadd.f32 %v291, %v321
      %v352 = vadd.f32 %v292, %v322
      %v353 = vadd.f32 %v293, %v323
      %v354 = vadd.f32 %v294, %v324
      %v355 = vadd.f32 %v295, %v325
      %v356 = vadd.f32 %v296, %v326
      %v357 = vadd.f32 %v297, %v327
      %v358 = vadd.f32 %v298, %v328
      %v359 = vadd.f32 %v299, %v329
      %v360 = vadd.f32 %v300, %v330
      %v361 = vadd.f32 %v301, %v331
      %v362 = vadd.f32 %v302, %v332
      %v363 = vadd.f32 %v303, %v333
      %v364 = vadd.f32 %v304, %v334
      %v365 = vadd.f32 %v305, %v335
      %v366 = vadd.f32 %v306, %v336
      %v367 = vadd.f32 %v307, %v337
      %v368 = vadd.f32 %v308, %v338
      %v369 = vadd.f32 %v309, %v339
      %v370 = vadd.f32 %v310, %v340
      %v371 = vadd.f32 %v311, %v341
      %v372 = vadd.f32 %v312, %v342
      %v373 = vadd.f32 %v313, %v343
      %v374 = vadd.f32 %v314, %v344
      %v375 = vadd.f32 %v315, %v345
      %v376 = vadd.f32 %v316, %v346
      %v377 = vadd.f32 %v317, %v347
      %v378 = vld [vmem:[%s270] sm:$0xff]
      %v379 = vld [vmem:[%s270 + $0x8] sm:$0xff]
      %v380 = vld [vmem:[%s270 + $0x10] sm:$0xff]
      %v381 = vld [vmem:[%s270 + $0x18] sm:$0xff]
      %v382 = vld [vmem:[%s270 + $0x20] sm:$0xff]
      %v383 = vld [vmem:[%s270 + $0x28] sm:$0xff]
      %v384 = vld [vmem:[%s270 + $0x30] sm:$0xff]
      %v385 = vld [vmem:[%s270 + $0x38] sm:$0xff]
      %v386 = vld [vmem:[%s270 + $0x40] sm:$0xff]
      %v387 = vld [vmem:[%s270 + $0x48] sm:$0xff]
      %v388 = vld [vmem:[%s270 + $0x50] sm:$0xff]
      %v389 = vld [vmem:[%s270 + $0x58] sm:$0xff]
      %v390 = vld [vmem:[%s270 + $0x60] sm:$0xff]
      %v391 = vld [vmem:[%s270 + $0x68] sm:$0xff]
      %v392 = vld [vmem:[%s270 + $0x70] sm:$0xff]
      %v393 = vld [vmem:[%s270 + $0x78] sm:$0xff]
      %v394 = vld [vmem:[%s270 + $0x80] sm:$0xff]
      %v395 = vld [vmem:[%s270 + $0x88] sm:$0xff]
      %v396 = vld [vmem:[%s270 + $0x90] sm:$0xff]
      %v397 = vld [vmem:[%s270 + $0x98] sm:$0xff]
      %v398 = vld [vmem:[%s270 + $0xa0] sm:$0xff]
      %v399 = vld [vmem:[%s270 + $0xa8] sm:$0xff]
      %v400 = vld [vmem:[%s270 + $0xb0] sm:$0xff]
      %v401 = vld [vmem:[%s270 + $0xb8] sm:$0xff]
      %v402 = vld [vmem:[%s270 + $0xc0] sm:$0xff]
      %v403 = vld [vmem:[%s270 + $0xc8] sm:$0xff]
      %v404 = vld [vmem:[%s270 + $0xd0] sm:$0xff]
      %v405 = vld [vmem:[%s270 + $0xd8] sm:$0xff]
      %v406 = vld [vmem:[%s270 + $0xe0] sm:$0xff]
      %v407 = vld [vmem:[%s270 + $0xe8] sm:$0xff]
      %v408 = vld [vmem:[%s270 + $0xf0] sm:$0xff]
      %v409 = vld [vmem:[%s270 + $0xf8] sm:$0xff]
      %v410 = vld [vmem:[%s270 + $0x100] sm:$0xff]
      %v411 = vld [vmem:[%s270 + $0x108] sm:$0xff]
      %v412 = vld [vmem:[%s270 + $0x110] sm:$0xff]
      %v413 = vld [vmem:[%s270 + $0x118] sm:$0xff]
      %v414 = vld [vmem:[%s270 + $0x120] sm:$0xff]
      %v415 = vld [vmem:[%s270 + $0x128] sm:$0xff]
      %v416 = vld [vmem:[%s270 + $0x130] sm:$0xff]
      %v417 = vld [vmem:[%s270 + $0x138] sm:$0xff]
      %v418 = vld [vmem:[%s270 + $0x140] sm:$0xff]
      %v419 = vld [vmem:[%s270 + $0x148] sm:$0xff]
      %v420 = vld [vmem:[%s270 + $0x150] sm:$0xff]
      %v421 = vld [vmem:[%s270 + $0x158] sm:$0xff]
      %v422 = vld [vmem:[%s270 + $0x160] sm:$0xff]
      %vm423 = vcmask 982016
      %v425 = vsel %vm423, %v378, 0
      %v428 = vsel %vm423, %v379, 0
      %v431 = vsel %vm423, %v380, 0
      %v434 = vsel %vm423, %v381, 0
      %v437 = vsel %vm423, %v382, 0
      %v440 = vsel %vm423, %v383, 0
      %v443 = vsel %vm423, %v384, 0
      %v446 = vsel %vm423, %v385, 0
      %v449 = vsel %vm423, %v386, 0
      %v452 = vsel %vm423, %v387, 0
      %v455 = vsel %vm423, %v388, 0
      %v458 = vsel %vm423, %v389, 0
      %v461 = vsel %vm423, %v390, 0
      %v464 = vsel %vm423, %v391, 0
      %v467 = vsel %vm423, %v392, 0
      %v470 = vsel %vm423, %v393, 0
      %v473 = vsel %vm423, %v394, 0
      %v476 = vsel %vm423, %v395, 0
      %v479 = vsel %vm423, %v396, 0
      %v482 = vsel %vm423, %v397, 0
      %v485 = vsel %vm423, %v398, 0
      %v488 = vsel %vm423, %v399, 0
      %v491 = vsel %vm423, %v400, 0
      %v494 = vsel %vm423, %v401, 0
      %v497 = vsel %vm423, %v402, 0
      %v500 = vsel %vm423, %v403, 0
      %v503 = vsel %vm423, %v404, 0
      %v506 = vsel %vm423, %v405, 0
      %v509 = vsel %vm423, %v406, 0
      %v512 = vsel %vm423, %v407, 0
      %v515 = vsel %vm423, %v408, 0
      %v518 = vsel %vm423, %v409, 0
      %v521 = vsel %vm423, %v410, 0
      %v524 = vsel %vm423, %v411, 0
      %v527 = vsel %vm423, %v412, 0
      %v530 = vsel %vm423, %v413, 0
      %v533 = vsel %vm423, %v414, 0
      %v536 = vsel %vm423, %v415, 0
      %v539 = vsel %vm423, %v416, 0
      %v542 = vsel %vm423, %v417, 0
      %v545 = vsel %vm423, %v418, 0
      %v548 = vsel %vm423, %v419, 0
      %v551 = vsel %vm423, %v420, 0
      %v554 = vsel %vm423, %v421, 0
      %v557 = vsel %vm423, %v422, 0
      %559 = vmatpush.msra.mxu0 0.0
      %560 = vmatpush.msra.mxu0 %v376
      %561 = vmatpush.msra.mxu0 %v374
      %562 = vmatpush.msra.mxu0 %v372
      %563 = vmatpush.msra.mxu0 %v370
      %564 = vmatpush.msra.mxu0 %v368
      %565 = vmatpush.msra.mxu0 %v366
      %566 = vmatpush.msra.mxu0 %v364
      %567 = vmatpush.msra.mxu0 %v362
      %568 = vmatpush.msra.mxu0 %v360
      %569 = vmatpush.msra.mxu0 %v358
      %570 = vmatpush.msra.mxu0 %v356
      %571 = vmatpush.msra.mxu0 %v354
      %572 = vmatpush.msra.mxu0 %v352
      %573 = vmatpush.msra.mxu0 %v350
      %574 = vmatpush.msra.mxu0 %v348
      %575 = vmatmul.f32.gmra.mxu0 %v425
      %v576 = vpop.f32.mrf.mxu0
      %v577 = vadd.f32 0.0, %v576
      %578 = vmatmul.f32.gmra.mxu0 %v428
      %v579 = vpop.f32.mrf.mxu0
      %v580 = vadd.f32 0.0, %v579
      %581 = vmatmul.f32.gmra.mxu0 %v431
      %v582 = vpop.f32.mrf.mxu0
      %v583 = vadd.f32 0.0, %v582
      %584 = vmatmul.f32.gmra.mxu0 %v434
      %v585 = vpop.f32.mrf.mxu0
      %v586 = vadd.f32 0.0, %v585
      %587 = vmatmul.f32.gmra.mxu0 %v437
      %v588 = vpop.f32.mrf.mxu0
      %v589 = vadd.f32 0.0, %v588
      %590 = vmatmul.f32.gmra.mxu0 %v440
      %v591 = vpop.f32.mrf.mxu0
      %v592 = vadd.f32 0.0, %v591
      %593 = vmatmul.f32.gmra.mxu0 %v443
      %v594 = vpop.f32.mrf.mxu0
      %v595 = vadd.f32 0.0, %v594
      %596 = vmatmul.f32.gmra.mxu0 %v446
      %v597 = vpop.f32.mrf.mxu0
      %v598 = vadd.f32 0.0, %v597
      %599 = vmatmul.f32.gmra.mxu0 %v449
      %v600 = vpop.f32.mrf.mxu0
      %v601 = vadd.f32 0.0, %v600
      %602 = vmatmul.f32.gmra.mxu0 %v452
      %v603 = vpop.f32.mrf.mxu0
      %v604 = vadd.f32 0.0, %v603
      %605 = vmatmul.f32.gmra.mxu0 %v455
      %v606 = vpop.f32.mrf.mxu0
      %v607 = vadd.f32 0.0, %v606
      %608 = vmatmul.f32.gmra.mxu0 %v458
      %v609 = vpop.f32.mrf.mxu0
      %v610 = vadd.f32 0.0, %v609
      %611 = vmatmul.f32.gmra.mxu0 %v461
      %v612 = vpop.f32.mrf.mxu0
      %v613 = vadd.f32 0.0, %v612
      %614 = vmatmul.f32.gmra.mxu0 %v464
      %v615 = vpop.f32.mrf.mxu0
      %v616 = vadd.f32 0.0, %v615
      %617 = vmatmul.f32.gmra.mxu0 %v467
      %v618 = vpop.f32.mrf.mxu0
      %v619 = vadd.f32 0.0, %v618
      %620 = vmatmul.f32.gmra.mxu0 %v470
      %v621 = vpop.f32.mrf.mxu0
      %v622 = vadd.f32 0.0, %v621
      %623 = vmatmul.f32.gmra.mxu0 %v473
      %v624 = vpop.f32.mrf.mxu0
      %v625 = vadd.f32 0.0, %v624
      %626 = vmatmul.f32.gmra.mxu0 %v476
      %v627 = vpop.f32.mrf.mxu0
      %v628 = vadd.f32 0.0, %v627
      %629 = vmatmul.f32.gmra.mxu0 %v479
      %v630 = vpop.f32.mrf.mxu0
      %v631 = vadd.f32 0.0, %v630
      %632 = vmatmul.f32.gmra.mxu0 %v482
      %v633 = vpop.f32.mrf.mxu0
      %v634 = vadd.f32 0.0, %v633
      %635 = vmatmul.f32.gmra.mxu0 %v485
      %v636 = vpop.f32.mrf.mxu0
      %v637 = vadd.f32 0.0, %v636
      %638 = vmatmul.f32.gmra.mxu0 %v488
      %v639 = vpop.f32.mrf.mxu0
      %v640 = vadd.f32 0.0, %v639
      %641 = vmatmul.f32.gmra.mxu0 %v491
      %v642 = vpop.f32.mrf.mxu0
      %v643 = vadd.f32 0.0, %v642
      %644 = vmatmul.f32.gmra.mxu0 %v494
      %v645 = vpop.f32.mrf.mxu0
      %v646 = vadd.f32 0.0, %v645
      %647 = vmatmul.f32.gmra.mxu0 %v497
      %v648 = vpop.f32.mrf.mxu0
      %v649 = vadd.f32 0.0, %v648
      %650 = vmatmul.f32.gmra.mxu0 %v500
      %v651 = vpop.f32.mrf.mxu0
      %v652 = vadd.f32 0.0, %v651
      %653 = vmatmul.f32.gmra.mxu0 %v503
      %v654 = vpop.f32.mrf.mxu0
      %v655 = vadd.f32 0.0, %v654
      %656 = vmatmul.f32.gmra.mxu0 %v506
      %v657 = vpop.f32.mrf.mxu0
      %v658 = vadd.f32 0.0, %v657
      %659 = vmatmul.f32.gmra.mxu0 %v509
      %v660 = vpop.f32.mrf.mxu0
      %v661 = vadd.f32 0.0, %v660
      %662 = vmatmul.f32.gmra.mxu0 %v512
      %v663 = vpop.f32.mrf.mxu0
      %v664 = vadd.f32 0.0, %v663
      %665 = vmatmul.f32.gmra.mxu0 %v515
      %v666 = vpop.f32.mrf.mxu0
      %v667 = vadd.f32 0.0, %v666
      %668 = vmatmul.f32.gmra.mxu0 %v518
      %v669 = vpop.f32.mrf.mxu0
      %v670 = vadd.f32 0.0, %v669
      %671 = vmatmul.f32.gmra.mxu0 %v521
      %v672 = vpop.f32.mrf.mxu0
      %v673 = vadd.f32 0.0, %v672
      %674 = vmatmul.f32.gmra.mxu0 %v524
      %v675 = vpop.f32.mrf.mxu0
      %v676 = vadd.f32 0.0, %v675
      %677 = vmatmul.f32.gmra.mxu0 %v527
      %v678 = vpop.f32.mrf.mxu0
      %v679 = vadd.f32 0.0, %v678
      %680 = vmatmul.f32.gmra.mxu0 %v530
      %v681 = vpop.f32.mrf.mxu0
      %v682 = vadd.f32 0.0, %v681
      %683 = vmatmul.f32.gmra.mxu0 %v533
      %v684 = vpop.f32.mrf.mxu0
      %v685 = vadd.f32 0.0, %v684
      %686 = vmatmul.f32.gmra.mxu0 %v536
      %v687 = vpop.f32.mrf.mxu0
      %v688 = vadd.f32 0.0, %v687
      %689 = vmatmul.f32.gmra.mxu0 %v539
      %v690 = vpop.f32.mrf.mxu0
      %v691 = vadd.f32 0.0, %v690
      %692 = vmatmul.f32.gmra.mxu0 %v542
      %v693 = vpop.f32.mrf.mxu0
      %v694 = vadd.f32 0.0, %v693
      %695 = vmatmul.f32.gmra.mxu0 %v545
      %v696 = vpop.f32.mrf.mxu0
      %v697 = vadd.f32 0.0, %v696
      %698 = vmatmul.f32.gmra.mxu0 %v548
      %v699 = vpop.f32.mrf.mxu0
      %v700 = vadd.f32 0.0, %v699
      %701 = vmatmul.f32.gmra.mxu0 %v551
      %v702 = vpop.f32.mrf.mxu0
      %v703 = vadd.f32 0.0, %v702
      %704 = vmatmul.f32.gmra.mxu0 %v554
      %v705 = vpop.f32.mrf.mxu0
      %v706 = vadd.f32 0.0, %v705
      %707 = vmatmul.f32.gmra.mxu0 %v557
      %v708 = vpop.f32.mrf.mxu0
      %v709 = vadd.f32 0.0, %v708
      %710 = vdwg.mxu0
      %711 = vmatpush.msra.mxu0 0.0
      %712 = vmatpush.msra.mxu0 %v377
      %713 = vmatpush.msra.mxu0 %v375
      %714 = vmatpush.msra.mxu0 %v373
      %715 = vmatpush.msra.mxu0 %v371
      %716 = vmatpush.msra.mxu0 %v369
      %717 = vmatpush.msra.mxu0 %v367
      %718 = vmatpush.msra.mxu0 %v365
      %719 = vmatpush.msra.mxu0 %v363
      %720 = vmatpush.msra.mxu0 %v361
      %721 = vmatpush.msra.mxu0 %v359
      %722 = vmatpush.msra.mxu0 %v357
      %723 = vmatpush.msra.mxu0 %v355
      %724 = vmatpush.msra.mxu0 %v353
      %725 = vmatpush.msra.mxu0 %v351
      %726 = vmatpush.msra.mxu0 %v349
      %727 = vmatmul.f32.gmra.mxu0 %v425
      %v728 = vpop.f32.mrf.mxu0
      %v729 = vadd.f32 0.0, %v728
      %730 = vmatmul.f32.gmra.mxu0 %v428
      %v731 = vpop.f32.mrf.mxu0
      %v732 = vadd.f32 0.0, %v731
      %733 = vmatmul.f32.gmra.mxu0 %v431
      %v734 = vpop.f32.mrf.mxu0
      %v735 = vadd.f32 0.0, %v734
      %736 = vmatmul.f32.gmra.mxu0 %v434
      %v737 = vpop.f32.mrf.mxu0
      %v738 = vadd.f32 0.0, %v737
      %739 = vmatmul.f32.gmra.mxu0 %v437
      %v740 = vpop.f32.mrf.mxu0
      %v741 = vadd.f32 0.0, %v740
      %742 = vmatmul.f32.gmra.mxu0 %v440
      %v743 = vpop.f32.mrf.mxu0
      %v744 = vadd.f32 0.0, %v743
      %745 = vmatmul.f32.gmra.mxu0 %v443
      %v746 = vpop.f32.mrf.mxu0
      %v747 = vadd.f32 0.0, %v746
      %748 = vmatmul.f32.gmra.mxu0 %v446
      %v749 = vpop.f32.mrf.mxu0
      %v750 = vadd.f32 0.0, %v749
      %751 = vmatmul.f32.gmra.mxu0 %v449
      %v752 = vpop.f32.mrf.mxu0
      %v753 = vadd.f32 0.0, %v752
      %754 = vmatmul.f32.gmra.mxu0 %v452
      %v755 = vpop.f32.mrf.mxu0
      %v756 = vadd.f32 0.0, %v755
      %757 = vmatmul.f32.gmra.mxu0 %v455
      %v758 = vpop.f32.mrf.mxu0
      %v759 = vadd.f32 0.0, %v758
      %760 = vmatmul.f32.gmra.mxu0 %v458
      %v761 = vpop.f32.mrf.mxu0
      %v762 = vadd.f32 0.0, %v761
      %763 = vmatmul.f32.gmra.mxu0 %v461
      %v764 = vpop.f32.mrf.mxu0
      %v765 = vadd.f32 0.0, %v764
      %766 = vmatmul.f32.gmra.mxu0 %v464
      %v767 = vpop.f32.mrf.mxu0
      %v768 = vadd.f32 0.0, %v767
      %769 = vmatmul.f32.gmra.mxu0 %v467
      %v770 = vpop.f32.mrf.mxu0
      %v771 = vadd.f32 0.0, %v770
      %772 = vmatmul.f32.gmra.mxu0 %v470
      %v773 = vpop.f32.mrf.mxu0
      %v774 = vadd.f32 0.0, %v773
      %775 = vmatmul.f32.gmra.mxu0 %v473
      %v776 = vpop.f32.mrf.mxu0
      %v777 = vadd.f32 0.0, %v776
      %778 = vmatmul.f32.gmra.mxu0 %v476
      %v779 = vpop.f32.mrf.mxu0
      %v780 = vadd.f32 0.0, %v779
      %781 = vmatmul.f32.gmra.mxu0 %v479
      %v782 = vpop.f32.mrf.mxu0
      %v783 = vadd.f32 0.0, %v782
      %784 = vmatmul.f32.gmra.mxu0 %v482
      %v785 = vpop.f32.mrf.mxu0
      %v786 = vadd.f32 0.0, %v785
      %787 = vmatmul.f32.gmra.mxu0 %v485
      %v788 = vpop.f32.mrf.mxu0
      %v789 = vadd.f32 0.0, %v788
      %790 = vmatmul.f32.gmra.mxu0 %v488
      %v791 = vpop.f32.mrf.mxu0
      %v792 = vadd.f32 0.0, %v791
      %793 = vmatmul.f32.gmra.mxu0 %v491
      %v794 = vpop.f32.mrf.mxu0
      %v795 = vadd.f32 0.0, %v794
      %796 = vmatmul.f32.gmra.mxu0 %v494
      %v797 = vpop.f32.mrf.mxu0
      %v798 = vadd.f32 0.0, %v797
      %799 = vmatmul.f32.gmra.mxu0 %v497
      %v800 = vpop.f32.mrf.mxu0
      %v801 = vadd.f32 0.0, %v800
      %802 = vmatmul.f32.gmra.mxu0 %v500
      %v803 = vpop.f32.mrf.mxu0
      %v804 = vadd.f32 0.0, %v803
      %805 = vmatmul.f32.gmra.mxu0 %v503
      %v806 = vpop.f32.mrf.mxu0
      %v807 = vadd.f32 0.0, %v806
      %808 = vmatmul.f32.gmra.mxu0 %v506
      %v809 = vpop.f32.mrf.mxu0
      %v810 = vadd.f32 0.0, %v809
      %811 = vmatmul.f32.gmra.mxu0 %v509
      %v812 = vpop.f32.mrf.mxu0
      %v813 = vadd.f32 0.0, %v812
      %814 = vmatmul.f32.gmra.mxu0 %v512
      %v815 = vpop.f32.mrf.mxu0
      %v816 = vadd.f32 0.0, %v815
      %817 = vmatmul.f32.gmra.mxu0 %v515
      %v818 = vpop.f32.mrf.mxu0
      %v819 = vadd.f32 0.0, %v818
      %820 = vmatmul.f32.gmra.mxu0 %v518
      %v821 = vpop.f32.mrf.mxu0
      %v822 = vadd.f32 0.0, %v821
      %823 = vmatmul.f32.gmra.mxu0 %v521
      %v824 = vpop.f32.mrf.mxu0
      %v825 = vadd.f32 0.0, %v824
      %826 = vmatmul.f32.gmra.mxu0 %v524
      %v827 = vpop.f32.mrf.mxu0
      %v828 = vadd.f32 0.0, %v827
      %829 = vmatmul.f32.gmra.mxu0 %v527
      %v830 = vpop.f32.mrf.mxu0
      %v831 = vadd.f32 0.0, %v830
      %832 = vmatmul.f32.gmra.mxu0 %v530
      %v833 = vpop.f32.mrf.mxu0
      %v834 = vadd.f32 0.0, %v833
      %835 = vmatmul.f32.gmra.mxu0 %v533
      %v836 = vpop.f32.mrf.mxu0
      %v837 = vadd.f32 0.0, %v836
      %838 = vmatmul.f32.gmra.mxu0 %v536
      %v839 = vpop.f32.mrf.mxu0
      %v840 = vadd.f32 0.0, %v839
      %841 = vmatmul.f32.gmra.mxu0 %v539
      %v842 = vpop.f32.mrf.mxu0
      %v843 = vadd.f32 0.0, %v842
      %844 = vmatmul.f32.gmra.mxu0 %v542
      %v845 = vpop.f32.mrf.mxu0
      %v846 = vadd.f32 0.0, %v845
      %847 = vmatmul.f32.gmra.mxu0 %v545
      %v848 = vpop.f32.mrf.mxu0
      %v849 = vadd.f32 0.0, %v848
      %850 = vmatmul.f32.gmra.mxu0 %v548
      %v851 = vpop.f32.mrf.mxu0
      %v852 = vadd.f32 0.0, %v851
      %853 = vmatmul.f32.gmra.mxu0 %v551
      %v854 = vpop.f32.mrf.mxu0
      %v855 = vadd.f32 0.0, %v854
      %856 = vmatmul.f32.gmra.mxu0 %v554
      %v857 = vpop.f32.mrf.mxu0
      %v858 = vadd.f32 0.0, %v857
      %859 = vmatmul.f32.gmra.mxu0 %v557
      %v860 = vpop.f32.mrf.mxu0
      %v861 = vadd.f32 0.0, %v860
      %862 = vdwg.mxu0
      %863 = vst [vmem:[%s285] sm:$0xff] %v577
      %vm864 = vcmask 556032
      %865 = vst.msk [vmem:[%s285 + $0x8] sm:$0xff] %vm864, %v729
      %866 = vst [vmem:[%s285 + $0x10] sm:$0xff] %v580
      %867 = vst.msk [vmem:[%s285 + $0x18] sm:$0xff] %vm864, %v732
      %868 = vst [vmem:[%s285 + $0x20] sm:$0xff] %v583
      %869 = vst.msk [vmem:[%s285 + $0x28] sm:$0xff] %vm864, %v735
      %870 = vst [vmem:[%s285 + $0x30] sm:$0xff] %v586
      %871 = vst.msk [vmem:[%s285 + $0x38] sm:$0xff] %vm864, %v738
      %872 = vst [vmem:[%s285 + $0x40] sm:$0xff] %v589
      %873 = vst.msk [vmem:[%s285 + $0x48] sm:$0xff] %vm864, %v741
      %874 = vst [vmem:[%s285 + $0x50] sm:$0xff] %v592
      %875 = vst.msk [vmem:[%s285 + $0x58] sm:$0xff] %vm864, %v744
      %876 = vst [vmem:[%s285 + $0x60] sm:$0xff] %v595
      %877 = vst.msk [vmem:[%s285 + $0x68] sm:$0xff] %vm864, %v747
      %878 = vst [vmem:[%s285 + $0x70] sm:$0xff] %v598
      %879 = vst.msk [vmem:[%s285 + $0x78] sm:$0xff] %vm864, %v750
      %880 = vst [vmem:[%s285 + $0x80] sm:$0xff] %v601
      %881 = vst.msk [vmem:[%s285 + $0x88] sm:$0xff] %vm864, %v753
      %882 = vst [vmem:[%s285 + $0x90] sm:$0xff] %v604
      %883 = vst.msk [vmem:[%s285 + $0x98] sm:$0xff] %vm864, %v756
      %884 = vst [vmem:[%s285 + $0xa0] sm:$0xff] %v607
      %885 = vst.msk [vmem:[%s285 + $0xa8] sm:$0xff] %vm864, %v759
      %886 = vst [vmem:[%s285 + $0xb0] sm:$0xff] %v610
      %887 = vst.msk [vmem:[%s285 + $0xb8] sm:$0xff] %vm864, %v762
      %888 = vst [vmem:[%s285 + $0xc0] sm:$0xff] %v613
      %889 = vst.msk [vmem:[%s285 + $0xc8] sm:$0xff] %vm864, %v765
      %890 = vst [vmem:[%s285 + $0xd0] sm:$0xff] %v616
      %891 = vst.msk [vmem:[%s285 + $0xd8] sm:$0xff] %vm864, %v768
      %892 = vst [vmem:[%s285 + $0xe0] sm:$0xff] %v619
      %893 = vst.msk [vmem:[%s285 + $0xe8] sm:$0xff] %vm864, %v771
      %894 = vst [vmem:[%s285 + $0xf0] sm:$0xff] %v622
      %895 = vst.msk [vmem:[%s285 + $0xf8] sm:$0xff] %vm864, %v774
      %896 = vst [vmem:[%s285 + $0x100] sm:$0xff] %v625
      %897 = vst.msk [vmem:[%s285 + $0x108] sm:$0xff] %vm864, %v777
      %898 = vst [vmem:[%s285 + $0x110] sm:$0xff] %v628
      %899 = vst.msk [vmem:[%s285 + $0x118] sm:$0xff] %vm864, %v780
      %900 = vst [vmem:[%s285 + $0x120] sm:$0xff] %v631
      %901 = vst.msk [vmem:[%s285 + $0x128] sm:$0xff] %vm864, %v783
      %902 = vst [vmem:[%s285 + $0x130] sm:$0xff] %v634
      %903 = vst.msk [vmem:[%s285 + $0x138] sm:$0xff] %vm864, %v786
      %904 = vst [vmem:[%s285 + $0x140] sm:$0xff] %v637
      %905 = vst.msk [vmem:[%s285 + $0x148] sm:$0xff] %vm864, %v789
      %906 = vst [vmem:[%s285 + $0x150] sm:$0xff] %v640
      %907 = vst.msk [vmem:[%s285 + $0x158] sm:$0xff] %vm864, %v792
      %908 = vst [vmem:[%s285 + $0x160] sm:$0xff] %v643
      %909 = vst.msk [vmem:[%s285 + $0x168] sm:$0xff] %vm864, %v795
      %910 = vst [vmem:[%s285 + $0x170] sm:$0xff] %v646
      %911 = vst.msk [vmem:[%s285 + $0x178] sm:$0xff] %vm864, %v798
      %912 = vst [vmem:[%s285 + $0x180] sm:$0xff] %v649
      %913 = vst.msk [vmem:[%s285 + $0x188] sm:$0xff] %vm864, %v801
      %914 = vst [vmem:[%s285 + $0x190] sm:$0xff] %v652
      %915 = vst.msk [vmem:[%s285 + $0x198] sm:$0xff] %vm864, %v804
      %916 = vst [vmem:[%s285 + $0x1a0] sm:$0xff] %v655
      %917 = vst.msk [vmem:[%s285 + $0x1a8] sm:$0xff] %vm864, %v807
      %918 = vst [vmem:[%s285 + $0x1b0] sm:$0xff] %v658
      %919 = vst.msk [vmem:[%s285 + $0x1b8] sm:$0xff] %vm864, %v810
      %920 = vst [vmem:[%s285 + $0x1c0] sm:$0xff] %v661
      %921 = vst.msk [vmem:[%s285 + $0x1c8] sm:$0xff] %vm864, %v813
      %922 = vst [vmem:[%s285 + $0x1d0] sm:$0xff] %v664
      %923 = vst.msk [vmem:[%s285 + $0x1d8] sm:$0xff] %vm864, %v816
      %924 = vst [vmem:[%s285 + $0x1e0] sm:$0xff] %v667
      %925 = vst.msk [vmem:[%s285 + $0x1e8] sm:$0xff] %vm864, %v819
      %926 = vst [vmem:[%s285 + $0x1f0] sm:$0xff] %v670
      %927 = vst.msk [vmem:[%s285 + $0x1f8] sm:$0xff] %vm864, %v822
      %928 = vst [vmem:[%s285 + $0x200] sm:$0xff] %v673
      %929 = vst.msk [vmem:[%s285 + $0x208] sm:$0xff] %vm864, %v825
      %930 = vst [vmem:[%s285 + $0x210] sm:$0xff] %v676
      %931 = vst.msk [vmem:[%s285 + $0x218] sm:$0xff] %vm864, %v828
      %932 = vst [vmem:[%s285 + $0x220] sm:$0xff] %v679
      %933 = vst.msk [vmem:[%s285 + $0x228] sm:$0xff] %vm864, %v831
      %934 = vst [vmem:[%s285 + $0x230] sm:$0xff] %v682
      %935 = vst.msk [vmem:[%s285 + $0x238] sm:$0xff] %vm864, %v834
      %936 = vst [vmem:[%s285 + $0x240] sm:$0xff] %v685
      %937 = vst.msk [vmem:[%s285 + $0x248] sm:$0xff] %vm864, %v837
      %938 = vst [vmem:[%s285 + $0x250] sm:$0xff] %v688
      %939 = vst.msk [vmem:[%s285 + $0x258] sm:$0xff] %vm864, %v840
      %940 = vst [vmem:[%s285 + $0x260] sm:$0xff] %v691
      %941 = vst.msk [vmem:[%s285 + $0x268] sm:$0xff] %vm864, %v843
      %942 = vst [vmem:[%s285 + $0x270] sm:$0xff] %v694
      %943 = vst.msk [vmem:[%s285 + $0x278] sm:$0xff] %vm864, %v846
      %944 = vst [vmem:[%s285 + $0x280] sm:$0xff] %v697
      %945 = vst.msk [vmem:[%s285 + $0x288] sm:$0xff] %vm864, %v849
      %946 = vst [vmem:[%s285 + $0x290] sm:$0xff] %v700
      %947 = vst.msk [vmem:[%s285 + $0x298] sm:$0xff] %vm864, %v852
      %948 = vst [vmem:[%s285 + $0x2a0] sm:$0xff] %v703
      %949 = vst.msk [vmem:[%s285 + $0x2a8] sm:$0xff] %vm864, %v855
      %950 = vst [vmem:[%s285 + $0x2b0] sm:$0xff] %v706
      %951 = vst.msk [vmem:[%s285 + $0x2b8] sm:$0xff] %vm864, %v858
      %952 = vst [vmem:[%s285 + $0x2c0] sm:$0xff] %v709
      %953 = vst.msk [vmem:[%s285 + $0x2c8] sm:$0xff] %vm864, %v861
      %s954 = smul.u32 45, %s20
      %s955 = smul.u32 2, %s21
      %p956 = scmp.lt.s32.totalorder %s19, 0
      %s957 = scalar_select %p956, %s19, 0
      %p958 = scmp.lt.s32.totalorder %s954, 89
      %s959 = scalar_select %p958, %s954, 89
      %p960 = scmp.lt.s32.totalorder %s955, 1
      %s961 = scalar_select %p960, %s955, 1
      %s962 = smul.addr %s959, 2
      %s963 = sadd.s32 %s961, %s962
      %s964 = smul.addr %s957, 180
      %s965 = sadd.s32 %s963, %s964
      %s966 = smul.addr %s965, 8
      %s967 = scalar_lea.vmem %s3, %s966
      // Predicated region
      $region33: #{tpu_custom_call.1} parent=31 // pred_check
        %p968 = pneg %p137
      $region34: #{tpu_custom_call.1} parent=31 // pred_check_branch
        %970 = sbr.rel (%p968) target = $region36
      $region35: #{tpu_custom_call.1} parent=31 // pred_region
        %s971 = smul.u32 45, %s20
        %s972 = smul.u32 2, %s21
      $region36: #{tpu_custom_call.1} parent=31 // pred_fallthru
        _
    $region32: #{tpu_custom_call.1} parent=5 // pred_fallthru
      _
    %p973 = scmp.le.s32.totalorder 2, %s9
    // Predicated region
    $region37: #{tpu_custom_call.1} parent=5 // pred_check
      %p974 = pneg %p973
    $region38: #{tpu_custom_call.1} parent=5 // pred_check_branch
      %976 = sbr.rel (%p974) target = $region40
    $region39: #{tpu_custom_call.1} parent=5 // pred_region
      %s977 = ssub.s32 %s9, 2
      // Predicated region
      $region41: #{tpu_custom_call.1} parent=39 // pred_check
        %p978 = pneg %p143
      $region42: #{tpu_custom_call.1} parent=39 // pred_check_branch
        %980 = sbr.rel (%p978) target = $region44
      $region43: #{tpu_custom_call.1} parent=39 // pred_region
        %s981 = smul.u32 45, %s23
        %s982 = smul.u32 2, %s24
        %p983 = scmp.lt.s32.totalorder %s22, 0
        %s984 = scalar_select %p983, %s22, 0
        %p985 = scmp.lt.s32.totalorder %s981, 89
        %s986 = scalar_select %p985, %s981, 89
        %p987 = scmp.lt.s32.totalorder %s982, 1
        %s988 = scalar_select %p987, %s982, 1
        %s989 = smul.addr %s986, 2
        %s990 = sadd.s32 %s988, %s989
        %s991 = smul.addr %s984, 180
        %s992 = sadd.s32 %s990, %s991
        %s993 = smul.addr %s992, 8
        %s994 = scalar_lea.vmem %s3, %s993
      $region44: #{tpu_custom_call.1} parent=39 // pred_fallthru
        _
    $region40: #{tpu_custom_call.1} parent=5 // pred_fallthru
      _
  $region6: #{tpu_custom_call.1} parent=0 // loop_footer
    %s13 = sadd.s32 1, %s9
  $region7: #{tpu_custom_call.1} parent=0 // loop_footer_branch
    %8 = sbr.rel target = $region3
  $region8: #{tpu_custom_call.1} parent=0 // loop_exit
    _

</llo_original>
